<compile_context>
chip_gen: v7x
topology: tpu7x:2x2x1
jax: 0.10.0
libtpu: 0.0.40
codegen_flags: <defaults>
</compile_context>

<pallas_src>
import functools

import jax
import jax.numpy as jnp
from jax.experimental import pallas as pl
from jax.experimental.pallas import tpu as pltpu


# ----------------------------- parameter construction (plain JAX glue) -----------------------------

def get_hankel(seq_len: int, use_hankel_L: bool = False) -> jnp.ndarray:
    entries = jnp.arange(1, seq_len + 1, dtype=jnp.float32)
    i_plus_j = entries[:, None] + entries[None, :]
    if use_hankel_L:
        sgn = (-1.0) ** (i_plus_j - 2.0) + 1.0
        denom = (i_plus_j + 3.0) * (i_plus_j - 1.0) * (i_plus_j + 1.0)
        Z = sgn * (8.0 / denom)
    else:
        Z = 2.0 / (i_plus_j ** 3 - i_plus_j)
    return Z


def get_spectral_filters(seq_len: int, K: int, use_hankel_L: bool = False) -> jnp.ndarray:
    Z = get_hankel(seq_len, use_hankel_L)
    sigma, phi = jnp.linalg.eigh(Z)
    sigma_k = sigma[-K:]
    phi_k = phi[:, -K:]
    sigma_k = jnp.maximum(sigma_k, 1e-9)
    phi_k = phi_k * sigma_k ** 0.25
    return phi_k.astype(jnp.float32)


def init_params(seq_len: int, d_model: int, k: int, use_hankel_L: bool = False):
    """Deterministic init mirroring the shapes of the PyTorch module's parameters."""
    key = jax.random.PRNGKey(0)
    ks = jax.random.split(key, 6)

    def linear_init(kw, kb, fan_in, fan_out):
        bound = 1.0 / jnp.sqrt(fan_in)
        w = jax.random.uniform(kw, (fan_out, fan_in), jnp.float32, -bound, bound)
        b = jax.random.uniform(kb, (fan_out,), jnp.float32, -bound, bound)
        return w, b

    assert d_model != seq_len, "pre_proj is Identity when d_model == seq_len (not exercised here)"
    w_pre, b_pre = linear_init(ks[0], ks[1], d_model, seq_len)   # Linear(d_model, seq_len)
    w_q, b_q = linear_init(ks[2], ks[3], seq_len, k)             # Linear(seq_len, k)
    w_o, b_o = linear_init(ks[4], ks[5], k, d_model)             # Linear(k, d_model)

    return {
        "w_pre": w_pre, "b_pre": b_pre,
        "w_q": w_q, "b_q": b_q,
        "K_filt": get_spectral_filters(seq_len, k, use_hankel_L),  # (T, k)
        "V_filt": get_spectral_filters(seq_len, k, use_hankel_L),  # (T, k)
        "w_o": w_o, "b_o": b_o,
        "decay": jnp.ones((seq_len,), jnp.float32),
        "L": get_hankel(seq_len, use_hankel_L),                    # (T, T)
    }


# ----------------------------------------- Pallas kernel -----------------------------------------

def spectral_attention_kernel(
    x_full_ref,   # (BB, T, d)   full batch block of x (compute dtype) - used only at q == 0
    x_tile_ref,   # (BB, TQ, d)  query tile of x       (compute dtype)
    wq_ref,       # (d, kp)      folded pre_proj+q_proj weight, lane-padded (compute dtype)
    bq_ref,       # (1, kp)      folded q bias (f32)
    wkv_ref,      # (d, 2*kp)    folded [K | V] weights, lane-padded (compute dtype)
    bkv_ref,      # (1, 2*kp)    folded [K | V] offsets from b_pre (f32)
    wo_ref,       # (kp, d)      o_proj weight, transposed + row-padded (compute dtype)
    bo_ref,       # (1, d)       o_proj bias (f32)
    lmask_ref,    # (TQ, T)      tril(L)*decay[None,:] query-tile (compute dtype)
    o_ref,        # (BB, TQ, d)  output block (compute dtype)
    v_full,       # scratch (BB, T, kp)        V for the whole batch block
    kv_full,      # scratch (BB, T, d or kp)   K @ Wo^T (fold_wo) or K (no fold)
    *, fold_wo: bool,
):
    bb, t_full, d = x_full_ref.shape
    tq = x_tile_ref.shape[1]
    kp = wq_ref.shape[1]
    cd = x_full_ref.dtype                      # MXU operand dtype; accumulation is f32
    qi = pl.program_id(1)

    # --- per-batch-block work: compute K/V (and K@Wo^T) once, keep resident in scratch ---
    @pl.when(qi == 0)
    def _():
        x2d = x_full_ref[...].reshape(bb * t_full, d)
        kv = jnp.dot(x2d, wkv_ref[...], preferred_element_type=jnp.float32) + bkv_ref[...]
        k_mat = kv[:, :kp]                      # lane-aligned slices (kp % 128 == 0)
        v_full[...] = kv[:, kp:2 * kp].astype(cd).reshape(bb, t_full, kp)
        if fold_wo:
            kvo = jnp.dot(k_mat.astype(cd), wo_ref[...], preferred_element_type=jnp.float32)
            kv_full[...] = kvo.astype(cd).reshape(bb, t_full, d)
        else:
            kv_full[...] = k_mat.astype(cd).reshape(bb, t_full, kp)

    # --- per query-tile work ---
    xq = x_tile_ref[...].reshape(bb * tq, d)
    q = (jnp.dot(xq, wq_ref[...], preferred_element_type=jnp.float32)
         + bq_ref[...]).astype(cd).reshape(bb, tq, kp)

    # S[b,t,s] = <Q[b,t,:], V[b,s,:]>   (contraction on last dims, no explicit transpose)
    s = jnp.einsum("btk,bsk->bts", q, v_full[...], preferred_element_type=jnp.float32)

    # causal Hankel mixing with decay; mask multiply runs in the compute dtype (bf16 on v6e/v7x)
    a = (lmask_ref[...][None, :, :] * s.astype(lmask_ref.dtype)).astype(cd)

    if fold_wo:
        # out = A @ (K @ Wo^T) + bo  -- lane-dense final matmul
        out = jnp.einsum("bts,bsd->btd", a, kv_full[...],
                         preferred_element_type=jnp.float32) + bo_ref[...]
    else:
        y = jnp.einsum("bts,bsk->btk", a, kv_full[...], preferred_element_type=jnp.float32)
        out = (jnp.dot(y.reshape(bb * tq, kp).astype(cd), wo_ref[...],
                       preferred_element_type=jnp.float32) + bo_ref[...]).reshape(bb, tq, d)

    o_ref[...] = out.astype(o_ref.dtype)


# --------------------------------- tiling / budgeting heuristics ---------------------------------

def _round_up(x: int, m: int) -> int:
    return ((x + m - 1) // m) * m


def _vmem_budget_bytes() -> int:
    """Per-generation scoped-VMEM budget (do not hard-code 64 MiB)."""
    try:
        phys = int(pltpu.get_tpu_info().vmem_capacity_bytes)
    except Exception:
        phys = 128 * 1024 * 1024
    if phys >= 128 * 1024 * 1024:
        return 100 * 1024 * 1024              # v5e / v6e: raise toward the 128 MiB physical
    # v7x-class parts (64 MiB per TC): leave headroom, rely on Buffered(1) + query tiling
    return max(32 * 1024 * 1024, (phys * 3) // 4)


def _pick_query_tile(T: int) -> int:
    """Tile the query/time axis so (BB, TQ, T) intermediates stay bounded at large T."""
    if T <= 512:
        return T
    for tq in (512, 256, 128, 64, 32, 16, 8):
        if T % tq == 0:
            return tq
    return T


def _pick_batch_block(B: int, T: int, TQ: int, d: int, kp: int,
                      itemsize: int, vmem_budget: int) -> int:
    """Fill ~1024 MXU rows per step, but keep >= 2 batch blocks when B >= 2 so the
    'parallel' grid axis can shard across v7x's two TensorCores; respect the VMEM budget."""
    if B <= 1:
        return 1
    bb = max(1, min(B // 2, max(1, 1024 // max(T, 1))))

    def vmem_est(bb_):
        f32b = 4
        inter = 3 * bb_ * TQ * T * f32b                  # s, a (+ headroom)
        lm = 2 * TQ * T * itemsize                       # double-buffered mask tile
        scr = bb_ * T * (kp + max(kp, d)) * itemsize     # v_full + kv/kvo scratch
        xio = 2 * bb_ * (T + 2 * TQ) * d * itemsize      # x_full, x_tile, out blocks
        return inter + lm + scr + xio

    while bb > 1 and (B % bb != 0 or vmem_est(bb) > (vmem_budget * 3) // 5):
        bb -= 1
    return bb


# ----------------------------------------- host wrapper ------------------------------------------

def spectral_attention_pallas(x: jnp.ndarray, params: dict,
                              *, compute_dtype=jnp.float32) -> jnp.ndarray:
    B, T, d = x.shape
    k = params["w_q"].shape[0]
    kp = _round_up(k, 128)                         # lane-aligned Q/K/V segments
    f32 = jnp.float32
    hp = functools.partial(jnp.einsum, precision=jax.lax.Precision.HIGHEST)

    # ---- host-side parameter folding: pre_proj folded into Q/K/V (associativity) ----
    wpre_t = params["w_pre"].astype(f32).T         # (d, T)
    b_pre = params["b_pre"].astype(f32)            # (T,)

    def fold(w_right, b_right=None):
        w = hp("dt,tk->dk", wpre_t, w_right)       # (d, k)
        b = hp("t,tk->k", b_pre, w_right)          # (k,)
        if b_right is not None:
            b = b + b_right
        return w, b

    wq_f, bq_f = fold(params["w_q"].T.astype(f32), params["b_q"].astype(f32))
    wk_f, bk_f = fold(params["K_filt"].astype(f32))
    wv_f, bv_f = fold(params["V_filt"].astype(f32))

    def pad_cols(w, b):
        wp = jnp.zeros((d, kp), f32).at[:, :k].set(w)
        bp = jnp.zeros((kp,), f32).at[:k].set(b)
        return wp, bp

    wq_p, bq_p = pad_cols(wq_f, bq_f)
    wk_p, bk_p = pad_cols(wk_f, bk_f)
    wv_p, bv_p = pad_cols(wv_f, bv_f)

    w_q_in = wq_p.astype(compute_dtype)                                        # (d, kp)
    b_q_in = bq_p.reshape(1, kp).astype(f32)
    w_kv_in = jnp.concatenate([wk_p, wv_p], axis=1).astype(compute_dtype)      # (d, 2kp)
    b_kv_in = jnp.concatenate([bk_p, bv_p]).reshape(1, 2 * kp).astype(f32)

    wo_t = jnp.zeros((kp, d), f32).at[:k, :].set(params["w_o"].T).astype(compute_dtype)
    bo = params["b_o"].reshape(1, d).astype(f32)

    # causal Hankel mask with decay, precomputed once; stored in the compute dtype so the
    # (BB,TQ,T) mask multiply runs in bf16 on v6e/v7x (keep compute_dtype=f32 on v5e).
    lmask = (jnp.tril(params["L"]) * params["decay"][None, :]).astype(compute_dtype)  # (T, T)

    xc = x.astype(compute_dtype)
    itemsize = jnp.dtype(compute_dtype).itemsize
    vmem_budget = _vmem_budget_bytes()
    TQ = _pick_query_tile(T)
    NQ = T // TQ
    BB = _pick_batch_block(B, T, TQ, d, kp, itemsize, vmem_budget)
    fold_wo = d <= 256                             # skip the o_proj fold when d_model is wide

    def const_spec(shape):
        nd = len(shape)
        return pl.BlockSpec(shape, lambda b, q, _nd=nd: (0,) * _nd,
                            pipeline_mode=pl.Buffered(1))   # single-buffer grid-invariant operands

    grid_spec = pltpu.PrefetchScalarGridSpec(
        num_scalar_prefetch=0,
        grid=(B // BB, NQ),
        in_specs=[
            pl.BlockSpec((BB, T, d), lambda b, q: (b, 0, 0)),    # x (full batch block, for K/V)
            pl.BlockSpec((BB, TQ, d), lambda b, q: (b, q, 0)),   # x (query tile, for Q)
            const_spec((d, kp)),
            const_spec((1, kp)),
            const_spec((d, 2 * kp)),
            const_spec((1, 2 * kp)),
            const_spec((kp, d)),
            const_spec((1, d)),
            pl.BlockSpec((TQ, T), lambda b, q: (q, 0)),          # mask tile
        ],
        out_specs=pl.BlockSpec((BB, TQ, d), lambda b, q: (b, q, 0)),
        scratch_shapes=[
            pltpu.VMEM((BB, T, kp), compute_dtype),                        # V (whole block)
            pltpu.VMEM((BB, T, d if fold_wo else kp), compute_dtype),      # K@Wo^T or K
        ],
    )

    return pl.pallas_call(
        functools.partial(spectral_attention_kernel, fold_wo=fold_wo),
        out_shape=jax.ShapeDtypeStruct((B, T, d), compute_dtype),
        grid_spec=grid_spec,
        compiler_params=pltpu.CompilerParams(
            dimension_semantics=("parallel", "arbitrary"),
            vmem_limit_bytes=vmem_budget,
        ),
    )(xc, xc, w_q_in, b_q_in, w_kv_in, b_kv_in, wo_t, bo, lmask)


# ----------------------------------- pure-JAX reference (check) -----------------------------------

def spectral_attention_ref(x, params):
    hp = functools.partial(jnp.einsum, precision=jax.lax.Precision.HIGHEST)
    x_proj = hp("btd,sd->bts", x, params["w_pre"]) + params["b_pre"]
    Q = hp("bts,ks->btk", x_proj, params["w_q"]) + params["b_q"]
    K = hp("bti,ik->btk", x_proj, params["K_filt"])
    V = hp("bti,ik->btk", x_proj, params["V_filt"])
    Z = hp("btp,btn,t->btpn", V, K, params["decay"])
    L_masked = jnp.tril(params["L"])[None]
    H = hp("bts,bspn->btpn", L_masked, Z)
    Y = hp("btk,btkn->btn", Q, H)
    return hp("btk,dk->btd", Y, params["w_o"]) + params["b_o"]


# --------------------------------------------- main ----------------------------------------------

if __name__ == "__main__":
    B, T, d_model, k = 2, 8, 32, 4   # seq_len = T = 8

    params = init_params(seq_len=T, d_model=d_model, k=k, use_hankel_L=False)
    x = jax.random.normal(jax.random.fold_in(jax.random.PRNGKey(0), 1),
                          (B, T, d_model), dtype=jnp.float32)

    ref = jax.block_until_ready(spectral_attention_ref(x, params))

    # f32 path (exactness check)
    out = jax.block_until_ready(spectral_attention_pallas(x, params))
    assert out.shape == (B, T, d_model)
    assert jnp.allclose(out, ref, rtol=1e-2, atol=1e-2), "Pallas f32 output mismatch vs reference"

    # bf16 MXU-operand path (v6e/v7x perf mode): f32 accumulation, looser tolerance.
    out_bf16 = jax.block_until_ready(
        spectral_attention_pallas(x, params, compute_dtype=jnp.bfloat16))
    assert jnp.allclose(out_bf16.astype(jnp.float32), ref, rtol=5e-2, atol=5e-2), \
        "Pallas bf16 output mismatch vs reference"

    print("KERNEL_OK")
</pallas_src>

<mosaic_0001>
module attributes {stable_mosaic.version = 11 : i64} {
  func.func @spectral_attention_kernel(%arg0: i32, %arg1: i32, %arg2: memref<1x8x32xf32, #tpu.memory_space<vmem>>, %arg3: memref<1x8x32xf32, #tpu.memory_space<vmem>>, %arg4: memref<32x128xf32, #tpu.memory_space<vmem>>, %arg5: memref<1x128xf32, #tpu.memory_space<vmem>>, %arg6: memref<32x256xf32, #tpu.memory_space<vmem>>, %arg7: memref<1x256xf32, #tpu.memory_space<vmem>>, %arg8: memref<128x32xf32, #tpu.memory_space<vmem>>, %arg9: memref<1x32xf32, #tpu.memory_space<vmem>>, %arg10: memref<8x8xf32, #tpu.memory_space<vmem>>, %arg11: memref<1x8x32xf32, #tpu.memory_space<vmem>>, %arg12: memref<1x8x128xf32, #tpu.memory_space<vmem>>, %arg13: memref<1x8x32xf32, #tpu.memory_space<vmem>>) attributes {dimension_semantics = [#tpu.dimension_semantics<parallel>, #tpu.dimension_semantics<arbitrary>], iteration_bounds = array<i64: 2, 1>, scalar_prefetch = 0 : i64, scratch_operands = 2 : i64, tpu.core_type = #tpu.core_type<tc>, window_params = [{transform_indices = @transform_0, window_bounds = array<i64: 1, 8, 32>}, {transform_indices = @transform_1, window_bounds = array<i64: 1, 8, 32>}, {pipeline_mode = #tpu.pipeline_mode<synchronous>, transform_indices = @transform_2, window_bounds = array<i64: 32, 128>}, {pipeline_mode = #tpu.pipeline_mode<synchronous>, transform_indices = @transform_3, window_bounds = array<i64: 1, 128>}, {pipeline_mode = #tpu.pipeline_mode<synchronous>, transform_indices = @transform_4, window_bounds = array<i64: 32, 256>}, {pipeline_mode = #tpu.pipeline_mode<synchronous>, transform_indices = @transform_5, window_bounds = array<i64: 1, 256>}, {pipeline_mode = #tpu.pipeline_mode<synchronous>, transform_indices = @transform_6, window_bounds = array<i64: 128, 32>}, {pipeline_mode = #tpu.pipeline_mode<synchronous>, transform_indices = @transform_7, window_bounds = array<i64: 1, 32>}, {transform_indices = @transform_8, window_bounds = array<i64: 8, 8>}, {transform_indices = @transform_9, window_bounds = array<i64: 1, 8, 32>}]} {
    %c0_i32 = arith.constant 0 : i32
    %0 = arith.cmpi eq, %arg1, %c0_i32 : i32
    %1 = arith.extui %0 : i1 to i32
    %c0_i32_0 = arith.constant 0 : i32
    %2 = arith.cmpi ne, %1, %c0_i32_0 : i32
    scf.if %2 {
      %c0_22 = arith.constant 0 : index
      %c0_23 = arith.constant 0 : index
      %c0_24 = arith.constant 0 : index
      %23 = vector.load %arg2[%c0_22, %c0_23, %c0_24] : memref<1x8x32xf32, #tpu.memory_space<vmem>>, vector<1x8x32xf32>
      %24 = vector.shape_cast %23 : vector<1x8x32xf32> to vector<8x32xf32>
      %c0_25 = arith.constant 0 : index
      %c0_26 = arith.constant 0 : index
      %25 = vector.load %arg6[%c0_25, %c0_26] : memref<32x256xf32, #tpu.memory_space<vmem>>, vector<32x256xf32>
      %cst_27 = arith.constant dense<0.000000e+00> : vector<8x256xf32>
      %26 = tpu.matmul %24, %25, %cst_27 {dimension_numbers = #tpu.dot_dimension_numbers<[1], [0], [0], [1], [0, 0, 1, 1], [], []>} : vector<8x32xf32>, vector<32x256xf32>, vector<8x256xf32> -> vector<8x256xf32>
      %c0_28 = arith.constant 0 : index
      %c0_29 = arith.constant 0 : index
      %27 = vector.load %arg7[%c0_28, %c0_29] : memref<1x256xf32, #tpu.memory_space<vmem>>, vector<1x256xf32>
      %28 = vector.broadcast %27 : vector<1x256xf32> to vector<8x256xf32>
      %29 = arith.addf %26, %28 : vector<8x256xf32>
      %30 = vector.extract_strided_slice %29 {offsets = [0, 0], sizes = [8, 128], strides = [1, 1]} : vector<8x256xf32> to vector<8x128xf32>
      %31 = vector.extract_strided_slice %29 {offsets = [0, 128], sizes = [8, 128], strides = [1, 1]} : vector<8x256xf32> to vector<8x128xf32>
      %32 = vector.shape_cast %31 : vector<8x128xf32> to vector<1x8x128xf32>
      %c0_30 = arith.constant 0 : index
      %c0_31 = arith.constant 0 : index
      %c0_32 = arith.constant 0 : index
      %33 = vector.load %arg12[%c0_30, %c0_31, %c0_32] : memref<1x8x128xf32, #tpu.memory_space<vmem>>, vector<1x8x128xf32>
      tpu.vector_store %arg12[%c0_30, %c0_31, %c0_32], %32 {strides = array<i32>} : memref<1x8x128xf32, #tpu.memory_space<vmem>>, vector<1x8x128xf32>,
      %c0_33 = arith.constant 0 : index
      %c0_34 = arith.constant 0 : index
      %34 = vector.load %arg8[%c0_33, %c0_34] : memref<128x32xf32, #tpu.memory_space<vmem>>, vector<128x32xf32>
      %cst_35 = arith.constant dense<0.000000e+00> : vector<8x32xf32>
      %35 = tpu.matmul %30, %34, %cst_35 {dimension_numbers = #tpu.dot_dimension_numbers<[1], [0], [0], [1], [0, 0, 1, 1], [], []>} : vector<8x128xf32>, vector<128x32xf32>, vector<8x32xf32> -> vector<8x32xf32>
      %36 = vector.shape_cast %35 : vector<8x32xf32> to vector<1x8x32xf32>
      %c0_36 = arith.constant 0 : index
      %c0_37 = arith.constant 0 : index
      %c0_38 = arith.constant 0 : index
      %37 = vector.load %arg13[%c0_36, %c0_37, %c0_38] : memref<1x8x32xf32, #tpu.memory_space<vmem>>, vector<1x8x32xf32>
      tpu.vector_store %arg13[%c0_36, %c0_37, %c0_38], %36 {strides = array<i32>} : memref<1x8x32xf32, #tpu.memory_space<vmem>>, vector<1x8x32xf32>,
    } else {
    }
    %c0 = arith.constant 0 : index
    %c0_1 = arith.constant 0 : index
    %c0_2 = arith.constant 0 : index
    %3 = vector.load %arg3[%c0, %c0_1, %c0_2] : memref<1x8x32xf32, #tpu.memory_space<vmem>>, vector<1x8x32xf32>
    %4 = vector.shape_cast %3 : vector<1x8x32xf32> to vector<8x32xf32>
    %c0_3 = arith.constant 0 : index
    %c0_4 = arith.constant 0 : index
    %5 = vector.load %arg4[%c0_3, %c0_4] : memref<32x128xf32, #tpu.memory_space<vmem>>, vector<32x128xf32>
    %cst = arith.constant dense<0.000000e+00> : vector<8x128xf32>
    %6 = tpu.matmul %4, %5, %cst {dimension_numbers = #tpu.dot_dimension_numbers<[1], [0], [0], [1], [0, 0, 1, 1], [], []>} : vector<8x32xf32>, vector<32x128xf32>, vector<8x128xf32> -> vector<8x128xf32>
    %c0_5 = arith.constant 0 : index
    %c0_6 = arith.constant 0 : index
    %7 = vector.load %arg5[%c0_5, %c0_6] : memref<1x128xf32, #tpu.memory_space<vmem>>, vector<1x128xf32>
    %8 = vector.broadcast %7 : vector<1x128xf32> to vector<8x128xf32>
    %9 = arith.addf %6, %8 : vector<8x128xf32>
    %10 = vector.shape_cast %9 : vector<8x128xf32> to vector<1x8x128xf32>
    %c0_7 = arith.constant 0 : index
    %c0_8 = arith.constant 0 : index
    %c0_9 = arith.constant 0 : index
    %11 = vector.load %arg12[%c0_7, %c0_8, %c0_9] : memref<1x8x128xf32, #tpu.memory_space<vmem>>, vector<1x8x128xf32>
    "tpu.trace_start"() <{level = 10 : i32, message = "btk,bsk->bts"}> : () -> ()
    %cst_10 = arith.constant dense<0.000000e+00> : vector<1x8x8xf32>
    %12 = tpu.matmul %10, %11, %cst_10 {dimension_numbers = #tpu.dot_dimension_numbers<[2], [2], [1], [1], [0, 0, 0, 1, 1, 1], [0], [0]>} : vector<1x8x128xf32>, vector<1x8x128xf32>, vector<1x8x8xf32> -> vector<1x8x8xf32>
    "tpu.trace_stop"() : () -> ()
    %c0_11 = arith.constant 0 : index
    %c0_12 = arith.constant 0 : index
    %13 = vector.load %arg10[%c0_11, %c0_12] : memref<8x8xf32, #tpu.memory_space<vmem>>, vector<8x8xf32>
    %14 = vector.shape_cast %13 : vector<8x8xf32> to vector<1x8x8xf32>
    %15 = arith.mulf %14, %12 : vector<1x8x8xf32>
    %c0_13 = arith.constant 0 : index
    %c0_14 = arith.constant 0 : index
    %c0_15 = arith.constant 0 : index
    %16 = vector.load %arg13[%c0_13, %c0_14, %c0_15] : memref<1x8x32xf32, #tpu.memory_space<vmem>>, vector<1x8x32xf32>
    "tpu.trace_start"() <{level = 10 : i32, message = "bts,bsd->btd"}> : () -> ()
    %cst_16 = arith.constant dense<0.000000e+00> : vector<1x8x32xf32>
    %17 = tpu.matmul %15, %16, %cst_16 {dimension_numbers = #tpu.dot_dimension_numbers<[2], [1], [1], [2], [0, 0, 0, 1, 1, 2], [0], [0]>} : vector<1x8x8xf32>, vector<1x8x32xf32>, vector<1x8x32xf32> -> vector<1x8x32xf32>
    "tpu.trace_stop"() : () -> ()
    %c0_17 = arith.constant 0 : index
    %c0_18 = arith.constant 0 : index
    %18 = vector.load %arg9[%c0_17, %c0_18] : memref<1x32xf32, #tpu.memory_space<vmem>>, vector<1x32xf32>
    %19 = vector.shape_cast %18 : vector<1x32xf32> to vector<1x1x32xf32>
    %20 = vector.broadcast %19 : vector<1x1x32xf32> to vector<1x8x32xf32>
    %21 = arith.addf %17, %20 : vector<1x8x32xf32>
    %c0_19 = arith.constant 0 : index
    %c0_20 = arith.constant 0 : index
    %c0_21 = arith.constant 0 : index
    %22 = vector.load %arg11[%c0_19, %c0_20, %c0_21] : memref<1x8x32xf32, #tpu.memory_space<vmem>>, vector<1x8x32xf32>
    tpu.vector_store %arg11[%c0_19, %c0_20, %c0_21], %21 {strides = array<i32>} : memref<1x8x32xf32, #tpu.memory_space<vmem>>, vector<1x8x32xf32>,
    return
  }
  func.func @transform_0(%arg0: i32, %arg1: i32) -> (i32, i32, i32) {
    %c0_i32 = arith.constant 0 : i32
    %c0_i32_0 = arith.constant 0 : i32
    %c0_i32_1 = arith.constant 0 : i32
    return %arg0, %c0_i32, %c0_i32_0 : i32, i32, i32
  }
  func.func @transform_1(%arg0: i32, %arg1: i32) -> (i32, i32, i32) {
    %c0_i32 = arith.constant 0 : i32
    %c0_i32_0 = arith.constant 0 : i32
    return %arg0, %arg1, %c0_i32 : i32, i32, i32
  }
  func.func @transform_2(%arg0: i32, %arg1: i32) -> (i32, i32) {
    %c0_i32 = arith.constant 0 : i32
    %c0_i32_0 = arith.constant 0 : i32
    %c0_i32_1 = arith.constant 0 : i32
    return %c0_i32, %c0_i32_0 : i32, i32
  }
  func.func @transform_3(%arg0: i32, %arg1: i32) -> (i32, i32) {
    %c0_i32 = arith.constant 0 : i32
    %c0_i32_0 = arith.constant 0 : i32
    %c0_i32_1 = arith.constant 0 : i32
    return %c0_i32, %c0_i32_0 : i32, i32
  }
  func.func @transform_4(%arg0: i32, %arg1: i32) -> (i32, i32) {
    %c0_i32 = arith.constant 0 : i32
    %c0_i32_0 = arith.constant 0 : i32
    %c0_i32_1 = arith.constant 0 : i32
    return %c0_i32, %c0_i32_0 : i32, i32
  }
  func.func @transform_5(%arg0: i32, %arg1: i32) -> (i32, i32) {
    %c0_i32 = arith.constant 0 : i32
    %c0_i32_0 = arith.constant 0 : i32
    %c0_i32_1 = arith.constant 0 : i32
    return %c0_i32, %c0_i32_0 : i32, i32
  }
  func.func @transform_6(%arg0: i32, %arg1: i32) -> (i32, i32) {
    %c0_i32 = arith.constant 0 : i32
    %c0_i32_0 = arith.constant 0 : i32
    %c0_i32_1 = arith.constant 0 : i32
    return %c0_i32, %c0_i32_0 : i32, i32
  }
  func.func @transform_7(%arg0: i32, %arg1: i32) -> (i32, i32) {
    %c0_i32 = arith.constant 0 : i32
    %c0_i32_0 = arith.constant 0 : i32
    %c0_i32_1 = arith.constant 0 : i32
    return %c0_i32, %c0_i32_0 : i32, i32
  }
  func.func @transform_8(%arg0: i32, %arg1: i32) -> (i32, i32) {
    %c0_i32 = arith.constant 0 : i32
    %c0_i32_0 = arith.constant 0 : i32
    return %arg1, %c0_i32 : i32, i32
  }
  func.func @transform_9(%arg0: i32, %arg1: i32) -> (i32, i32, i32) {
    %c0_i32 = arith.constant 0 : i32
    %c0_i32_0 = arith.constant 0 : i32
    return %arg0, %arg1, %c0_i32 : i32, i32, i32
  }
}

</mosaic_0001>

<llo_original>
// kernel: tpu_custom_call.1
$region0: #{tpu_custom_call.1}
  #allocation0 [shape = 'u32[]', space=smem, size = 0x4, offset = 0x4, fixed_abs, tag = 'smem constant byte address 0x4 - core index']
  #allocation1 [shape = 'u32[144,128]{1,0:T(1,128)}', space=vmem, size = 0x12000, scoped, tag = 'internal scratch']
  #allocation2 [shape = 'f32[1,8,128]{2,1,0:T(8,128)}', space=vmem, size = 0x1000, scoped, tag = 'scratch operand']
  #allocation3 [shape = 'f32[1,8,32]{2,1,0:T(8,128)}', space=vmem, size = 0x1000, scoped, tag = 'scratch operand']
  %s0 = inlined_call_operand.hbm [shape: f32[2,8,32], index: 0, kind: input, shape index: {}]
  %s1 = inlined_call_operand.hbm [shape: f32[2,8,32], index: 1, kind: input, shape index: {}]
  %s2 = inlined_call_operand.hbm [shape: f32[32,128], index: 2, kind: input, shape index: {}]
  %s3 = inlined_call_operand.hbm [shape: f32[1,128], index: 3, kind: input, shape index: {}]
  %s4 = inlined_call_operand.hbm [shape: f32[32,256], index: 4, kind: input, shape index: {}]
  %s5 = inlined_call_operand.hbm [shape: f32[1,256], index: 5, kind: input, shape index: {}]
  %s6 = inlined_call_operand.hbm [shape: f32[128,32], index: 6, kind: input, shape index: {}]
  %s7 = inlined_call_operand.hbm [shape: f32[1,32], index: 7, kind: input, shape index: {}]
  %s8 = inlined_call_operand.hbm [shape: f32[8,8], index: 8, kind: input, shape index: {}]
  %s9 = inlined_call_operand.hbm [shape: f32[2,8,32], index: 9, kind: output, shape index: {}]
  %s10 = sld [smem:[#allocation0]]
  $region109: #{tpu_custom_call.1} parent=0
    _
  %s12 = ssub.s32 1, %s10
  %s13 = scalar_select 0, %s12, %s10
  $region1: #{tpu_custom_call.1} parent=0
    #allocation4 [shape = 'u8[8192]{0}', space=vmem, size = 0x2000, scoped, tag = 'input window, operand 0']
    #allocation5 [shape = 's32[2]{0}', space=sflag, size = 0x8, scoped, tag = 'scoped memory for tpu_custom_call.1']
    #allocation6 [shape = 's32[2]{0}', space=sflag, size = 0x8, scoped, tag = 'scoped memory for tpu_custom_call.1']
    #allocation7 [shape = 'u8[8192]{0}', space=vmem, size = 0x2000, scoped, tag = 'input window, operand 1']
    #allocation8 [shape = 's32[2]{0}', space=sflag, size = 0x8, scoped, tag = 'scoped memory for tpu_custom_call.1']
    #allocation9 [shape = 'u8[16384]{0}', space=vmem, size = 0x4000, scoped, tag = 'input window, operand 2, single buffered']
    #allocation10 [shape = 'u8[512]{0}', space=vmem, size = 0x400, scoped, tag = 'input window, operand 3, single buffered']
    #allocation11 [shape = 's32[1]{0}', space=sflag, size = 0x4, scoped, tag = 'scoped memory for tpu_custom_call.1']
    #allocation12 [shape = 'u8[32768]{0}', space=vmem, size = 0x8000, scoped, tag = 'input window, operand 4, single buffered']
    #allocation13 [shape = 'u8[1024]{0}', space=vmem, size = 0x400, scoped, tag = 'input window, operand 5, single buffered']
    #allocation14 [shape = 's32[1]{0}', space=sflag, size = 0x4, scoped, tag = 'scoped memory for tpu_custom_call.1']
    #allocation15 [shape = 'u8[65536]{0}', space=vmem, size = 0x10000, scoped, tag = 'input window, operand 6, single buffered']
    #allocation16 [shape = 'u8[512]{0}', space=vmem, size = 0x400, scoped, tag = 'input window, operand 7, single buffered']
    #allocation17 [shape = 's32[1]{0}', space=sflag, size = 0x4, scoped, tag = 'scoped memory for tpu_custom_call.1']
    #allocation18 [shape = 'u8[4096]{0}', space=vmem, size = 0x1000, scoped, tag = 'input window, operand 8, single buffered']
    #allocation19 [shape = 'u8[8192]{0}', space=vmem, size = 0x2000, scoped, tag = 'output window, operand 0']
    %14 = vsyncpa [#allocation5], 0
    %s15 = scalar_lea.sflag [#allocation5], 1
    %16 = vsyncpa %s15, 0
    %17 = vsyncpa [#allocation8], 0
    %s18 = scalar_lea.sflag [#allocation8], 1
    %19 = vsyncpa %s18, 0
    %20 = vsyncpa [#allocation11], 0
    %21 = vsyncpa [#allocation14], 0
    %22 = vsyncpa [#allocation17], 0
    %23 = vsyncpa [#allocation6], 0
    %s24 = scalar_lea.sflag [#allocation6], 1
    %25 = vsyncpa %s24, 0
    loop: start=0, step=1, limit=4
    $region2: #{tpu_custom_call.1} parent=1 // loop_pre_header
      _
    $region3: #{tpu_custom_call.1} parent=1 // loop_header
      %s27 = sphi 0, %s31
      %p28 = scmp.ge.s32.totalorder %s27, 4
      %s34 = sphi 0, %s46
      %s35 = sphi 0, %s42
      %s36 = sphi 0, %s34
      %s37 = sphi 0, %s35
      %s38 = sphi 0, %s36
      %s39 = sphi 0, %s37
      %s49 = sphi 0, %s51
      %s52 = sphi 0, %s49
      %s53 = sphi 0, %s52
      %s69 = sphi 0, %s53
      %s77 = sphi 0, %s79
      %s80 = sphi 0, %s77
      %s81 = sphi 0, %s80
      %s97 = sphi 0, %s81
      %s101 = sphi 0, %s101
      %s103 = sphi 0, %s101
      %s104 = sphi 0, %s103
      %s118 = sphi 0, %s104
      %s122 = sphi 0, %s122
      %s124 = sphi 0, %s122
      %s125 = sphi 0, %s124
      %s139 = sphi 0, %s125
      %s143 = sphi 0, %s143
      %s145 = sphi 0, %s143
      %s146 = sphi 0, %s145
      %s160 = sphi 0, %s146
      %s164 = sphi 0, %s164
      %s166 = sphi 0, %s164
      %s167 = sphi 0, %s166
      %s181 = sphi 0, %s167
      %s185 = sphi 0, %s185
      %s187 = sphi 0, %s185
      %s188 = sphi 0, %s187
      %s202 = sphi 0, %s188
      %s206 = sphi 0, %s206
      %s208 = sphi 0, %s206
      %s209 = sphi 0, %s208
      %s223 = sphi 0, %s209
      %s229 = sphi 0, %s231
      %s232 = sphi 0, %s229
      %s233 = sphi 0, %s232
      %s249 = sphi 0, %s233
      %s257 = sphi 0, %s259
      %s260 = sphi 0, %s257
      %s261 = sphi 0, %s260
      %s277 = sphi 0, %s261
    $region4: #{tpu_custom_call.1} parent=1 // loop_header_branch
      %30 = sbr.rel (%p28) target = $region8
    $region5: #{tpu_custom_call.1} parent=1 // loop_body
      %s32 = ssub.s32 %s27, 1
      %s33 = ssub.s32 %s27, 2
      %s40 = sadd.s32 1, %s35
      %p41 = scmp.ge.s32.totalorder %s40, 1
      %s42 = scalar_select %p41, 0, %s40
      %s43 = sadd.s32 1, %s34
      %s44 = scalar_select %p41, %s43, %s34
      %p45 = scmp.ge.s32.totalorder %s44, 2
      %s46 = scalar_select %p45, 0, %s44
      %s47 = ssub.s32 %s34, %s46
      %p48 = scmp.eq.s32.totalorder %s47, 0
      %s50 = sadd.s32 %s49, 1
      %s51 = scalar_select %p48, %s49, %s50
      %p54 = pneg %p48
      %p55 = scmp.eq.s32.totalorder %s27, 1
      %p56 = por %p54, %p55
      %p57 = scmp.ne.s32.totalorder %s49, %s52
      %p58 = scmp.eq.s32.totalorder %s27, 0
      %p59 = por %p57, %p58
      %p60 = scmp.ne.s32.totalorder %s49, %s52
      %p61 = scmp.eq.s32.totalorder %s32, 1
      %p62 = por %p60, %p61
      %p63 = scmp.ne.s32.totalorder %s52, %s53
      %p64 = scmp.eq.s32.totalorder %s32, 0
      %p65 = por %p63, %p64
      %p66 = scmp.ne.s32.totalorder %s52, %s53
      %p67 = scmp.eq.s32.totalorder %s33, 1
      %p68 = por %p66, %p67
      %p70 = scmp.ne.s32.totalorder %s53, %s69
      %p71 = scmp.eq.s32.totalorder %s33, 0
      %p72 = por %p70, %p71
      %s73 = ssub.s32 %s34, %s46
      %s74 = ssub.s32 %s35, %s42
      %s75 = sor.u32 %s73, %s74
      %p76 = scmp.eq.s32.totalorder %s75, 0
      %s78 = sadd.s32 %s77, 1
      %s79 = scalar_select %p76, %s77, %s78
      %p82 = pneg %p76
      %p83 = scmp.eq.s32.totalorder %s27, 1
      %p84 = por %p82, %p83
      %p85 = scmp.ne.s32.totalorder %s77, %s80
      %p86 = scmp.eq.s32.totalorder %s27, 0
      %p87 = por %p85, %p86
      %p88 = scmp.ne.s32.totalorder %s77, %s80
      %p89 = scmp.eq.s32.totalorder %s32, 1
      %p90 = por %p88, %p89
      %p91 = scmp.ne.s32.totalorder %s80, %s81
      %p92 = scmp.eq.s32.totalorder %s32, 0
      %p93 = por %p91, %p92
      %p94 = scmp.ne.s32.totalorder %s80, %s81
      %p95 = scmp.eq.s32.totalorder %s33, 1
      %p96 = por %p94, %p95
      %p98 = scmp.ne.s32.totalorder %s81, %s97
      %p99 = scmp.eq.s32.totalorder %s33, 0
      %p100 = por %p98, %p99
      %s102 = sadd.s32 %s101, 1
      %p105 = scmp.eq.s32.totalorder %s27, 1
      %p106 = scmp.ne.s32.totalorder %s101, %s103
      %p107 = scmp.eq.s32.totalorder %s27, 0
      %p108 = por %p106, %p107
      %p109 = scmp.ne.s32.totalorder %s101, %s103
      %p110 = scmp.eq.s32.totalorder %s32, 1
      %p111 = por %p109, %p110
      %p112 = scmp.ne.s32.totalorder %s103, %s104
      %p113 = scmp.eq.s32.totalorder %s32, 0
      %p114 = por %p112, %p113
      %p115 = scmp.ne.s32.totalorder %s103, %s104
      %p116 = scmp.eq.s32.totalorder %s33, 1
      %p117 = por %p115, %p116
      %p119 = scmp.ne.s32.totalorder %s104, %s118
      %p120 = scmp.eq.s32.totalorder %s33, 0
      %p121 = por %p119, %p120
      %s123 = sadd.s32 %s122, 1
      %p126 = scmp.eq.s32.totalorder %s27, 1
      %p127 = scmp.ne.s32.totalorder %s122, %s124
      %p128 = scmp.eq.s32.totalorder %s27, 0
      %p129 = por %p127, %p128
      %p130 = scmp.ne.s32.totalorder %s122, %s124
      %p131 = scmp.eq.s32.totalorder %s32, 1
      %p132 = por %p130, %p131
      %p133 = scmp.ne.s32.totalorder %s124, %s125
      %p134 = scmp.eq.s32.totalorder %s32, 0
      %p135 = por %p133, %p134
      %p136 = scmp.ne.s32.totalorder %s124, %s125
      %p137 = scmp.eq.s32.totalorder %s33, 1
      %p138 = por %p136, %p137
      %p140 = scmp.ne.s32.totalorder %s125, %s139
      %p141 = scmp.eq.s32.totalorder %s33, 0
      %p142 = por %p140, %p141
      %s144 = sadd.s32 %s143, 1
      %p147 = scmp.eq.s32.totalorder %s27, 1
      %p148 = scmp.ne.s32.totalorder %s143, %s145
      %p149 = scmp.eq.s32.totalorder %s27, 0
      %p150 = por %p148, %p149
      %p151 = scmp.ne.s32.totalorder %s143, %s145
      %p152 = scmp.eq.s32.totalorder %s32, 1
      %p153 = por %p151, %p152
      %p154 = scmp.ne.s32.totalorder %s145, %s146
      %p155 = scmp.eq.s32.totalorder %s32, 0
      %p156 = por %p154, %p155
      %p157 = scmp.ne.s32.totalorder %s145, %s146
      %p158 = scmp.eq.s32.totalorder %s33, 1
      %p159 = por %p157, %p158
      %p161 = scmp.ne.s32.totalorder %s146, %s160
      %p162 = scmp.eq.s32.totalorder %s33, 0
      %p163 = por %p161, %p162
      %s165 = sadd.s32 %s164, 1
      %p168 = scmp.eq.s32.totalorder %s27, 1
      %p169 = scmp.ne.s32.totalorder %s164, %s166
      %p170 = scmp.eq.s32.totalorder %s27, 0
      %p171 = por %p169, %p170
      %p172 = scmp.ne.s32.totalorder %s164, %s166
      %p173 = scmp.eq.s32.totalorder %s32, 1
      %p174 = por %p172, %p173
      %p175 = scmp.ne.s32.totalorder %s166, %s167
      %p176 = scmp.eq.s32.totalorder %s32, 0
      %p177 = por %p175, %p176
      %p178 = scmp.ne.s32.totalorder %s166, %s167
      %p179 = scmp.eq.s32.totalorder %s33, 1
      %p180 = por %p178, %p179
      %p182 = scmp.ne.s32.totalorder %s167, %s181
      %p183 = scmp.eq.s32.totalorder %s33, 0
      %p184 = por %p182, %p183
      %s186 = sadd.s32 %s185, 1
      %p189 = scmp.eq.s32.totalorder %s27, 1
      %p190 = scmp.ne.s32.totalorder %s185, %s187
      %p191 = scmp.eq.s32.totalorder %s27, 0
      %p192 = por %p190, %p191
      %p193 = scmp.ne.s32.totalorder %s185, %s187
      %p194 = scmp.eq.s32.totalorder %s32, 1
      %p195 = por %p193, %p194
      %p196 = scmp.ne.s32.totalorder %s187, %s188
      %p197 = scmp.eq.s32.totalorder %s32, 0
      %p198 = por %p196, %p197
      %p199 = scmp.ne.s32.totalorder %s187, %s188
      %p200 = scmp.eq.s32.totalorder %s33, 1
      %p201 = por %p199, %p200
      %p203 = scmp.ne.s32.totalorder %s188, %s202
      %p204 = scmp.eq.s32.totalorder %s33, 0
      %p205 = por %p203, %p204
      %s207 = sadd.s32 %s206, 1
      %p210 = scmp.eq.s32.totalorder %s27, 1
      %p211 = scmp.ne.s32.totalorder %s206, %s208
      %p212 = scmp.eq.s32.totalorder %s27, 0
      %p213 = por %p211, %p212
      %p214 = scmp.ne.s32.totalorder %s206, %s208
      %p215 = scmp.eq.s32.totalorder %s32, 1
      %p216 = por %p214, %p215
      %p217 = scmp.ne.s32.totalorder %s208, %s209
      %p218 = scmp.eq.s32.totalorder %s32, 0
      %p219 = por %p217, %p218
      %p220 = scmp.ne.s32.totalorder %s208, %s209
      %p221 = scmp.eq.s32.totalorder %s33, 1
      %p222 = por %p220, %p221
      %p224 = scmp.ne.s32.totalorder %s209, %s223
      %p225 = scmp.eq.s32.totalorder %s33, 0
      %p226 = por %p224, %p225
      %s227 = ssub.s32 %s35, %s42
      %p228 = scmp.eq.s32.totalorder %s227, 0
      %s230 = sadd.s32 %s229, 1
      %s231 = scalar_select %p228, %s229, %s230
      %p234 = pneg %p228
      %p235 = scmp.eq.s32.totalorder %s27, 1
      %p236 = por %p234, %p235
      %p237 = scmp.ne.s32.totalorder %s229, %s232
      %p238 = scmp.eq.s32.totalorder %s27, 0
      %p239 = por %p237, %p238
      %p240 = scmp.ne.s32.totalorder %s229, %s232
      %p241 = scmp.eq.s32.totalorder %s32, 1
      %p242 = por %p240, %p241
      %p243 = scmp.ne.s32.totalorder %s232, %s233
      %p244 = scmp.eq.s32.totalorder %s32, 0
      %p245 = por %p243, %p244
      %p246 = scmp.ne.s32.totalorder %s232, %s233
      %p247 = scmp.eq.s32.totalorder %s33, 1
      %p248 = por %p246, %p247
      %p250 = scmp.ne.s32.totalorder %s233, %s249
      %p251 = scmp.eq.s32.totalorder %s33, 0
      %p252 = por %p250, %p251
      %s253 = ssub.s32 %s34, %s46
      %s254 = ssub.s32 %s35, %s42
      %s255 = sor.u32 %s253, %s254
      %p256 = scmp.eq.s32.totalorder %s255, 0
      %s258 = sadd.s32 %s257, 1
      %s259 = scalar_select %p256, %s257, %s258
      %p262 = pneg %p256
      %p263 = scmp.eq.s32.totalorder %s27, 1
      %p264 = por %p262, %p263
      %p265 = scmp.ne.s32.totalorder %s257, %s260
      %p266 = scmp.eq.s32.totalorder %s27, 0
      %p267 = por %p265, %p266
      %p268 = scmp.ne.s32.totalorder %s257, %s260
      %p269 = scmp.eq.s32.totalorder %s32, 1
      %p270 = por %p268, %p269
      %p271 = scmp.ne.s32.totalorder %s260, %s261
      %p272 = scmp.eq.s32.totalorder %s32, 0
      %p273 = por %p271, %p272
      %p274 = scmp.ne.s32.totalorder %s260, %s261
      %p275 = scmp.eq.s32.totalorder %s33, 1
      %p276 = por %p274, %p275
      %p278 = scmp.ne.s32.totalorder %s261, %s277
      %p279 = scmp.eq.s32.totalorder %s33, 0
      %p280 = por %p278, %p279
      %p281 = scmp.le.s32.totalorder 1, %s27
      %p282 = scmp.lt.s32.totalorder %s27, 3
      %p283 = pnand %p281, %p282
      %p284 = pneg %p283
      // Predicated region
      $region9: #{tpu_custom_call.1} parent=5 // pred_check
        _
      $region10: #{tpu_custom_call.1} parent=5 // pred_check_branch
        %286 = sbr.rel (%p283) target = $region12
      $region11: #{tpu_custom_call.1} parent=5 // pred_region
        %s287 = ssub.s32 %s27, 1
        // Predicated region
        $region13: #{tpu_custom_call.1} parent=11 // pred_check
          %p288 = pneg %p114
        $region14: #{tpu_custom_call.1} parent=11 // pred_check_branch
          %290 = sbr.rel (%p288) target = $region16
        $region15: #{tpu_custom_call.1} parent=11 // pred_region
          %s292 = ssub.s32 512, 512
          %293 = vsyncadd [#allocation8], %s292
          %s294 = sshll.u32 [#allocation9], 4
          %s295 = int_to_ptr.vmem [resolvable:$true] %s294
          %300 = dma.hbm_to_vmem [thread:$0]  %s2, 512, %s295, [#allocation8], 128, 128, 8
        $region16: #{tpu_custom_call.1} parent=11 // pred_fallthru
          _
        // Predicated region
        $region17: #{tpu_custom_call.1} parent=11 // pred_check
          %p301 = pneg %p135
        $region18: #{tpu_custom_call.1} parent=11 // pred_check_branch
          %303 = sbr.rel (%p301) target = $region20
        $region19: #{tpu_custom_call.1} parent=11 // pred_region
          %s305 = ssub.s32 16, 16
          %306 = vsyncadd [#allocation11], %s305
          %s308 = sshll.u32 [#allocation10], 4
          %s309 = int_to_ptr.vmem [resolvable:$true] %s308
          %311 = dma.hbm_to_vmem [thread:$0]  %s3, 16, %s309, [#allocation11]
        $region20: #{tpu_custom_call.1} parent=11 // pred_fallthru
          _
        // Predicated region
        $region21: #{tpu_custom_call.1} parent=11 // pred_check
          %p312 = pneg %p156
        $region22: #{tpu_custom_call.1} parent=11 // pred_check_branch
          %314 = sbr.rel (%p312) target = $region24
        $region23: #{tpu_custom_call.1} parent=11 // pred_region
          %s316 = ssub.s32 1024, 1024
          %317 = vsyncadd [#allocation11], %s316
          %s318 = sshll.u32 [#allocation12], 4
          %s319 = int_to_ptr.vmem [resolvable:$true] %s318
          %324 = dma.hbm_to_vmem [thread:$0]  %s4, 1024, %s319, [#allocation11], 256, 256, 16
        $region24: #{tpu_custom_call.1} parent=11 // pred_fallthru
          _
        // Predicated region
        $region25: #{tpu_custom_call.1} parent=11 // pred_check
          %p325 = pneg %p177
        $region26: #{tpu_custom_call.1} parent=11 // pred_check_branch
          %327 = sbr.rel (%p325) target = $region28
        $region27: #{tpu_custom_call.1} parent=11 // pred_region
          %s329 = ssub.s32 32, 32
          %330 = vsyncadd [#allocation14], %s329
          %s332 = sshll.u32 [#allocation13], 4
          %s333 = int_to_ptr.vmem [resolvable:$true] %s332
          %335 = dma.hbm_to_vmem [thread:$0]  %s5, 32, %s333, [#allocation14]
        $region28: #{tpu_custom_call.1} parent=11 // pred_fallthru
          _
        // Predicated region
        $region29: #{tpu_custom_call.1} parent=11 // pred_check
          %p336 = pneg %p198
        $region30: #{tpu_custom_call.1} parent=11 // pred_check_branch
          %338 = sbr.rel (%p336) target = $region32
        $region31: #{tpu_custom_call.1} parent=11 // pred_region
          %s340 = ssub.s32 2048, 2048
          %341 = vsyncadd [#allocation14], %s340
          %s342 = sshll.u32 [#allocation15], 4
          %s343 = int_to_ptr.vmem [resolvable:$true] %s342
          %348 = dma.hbm_to_vmem [thread:$0]  %s6, 2048, %s343, [#allocation14], 128, 128, 8
        $region32: #{tpu_custom_call.1} parent=11 // pred_fallthru
          _
        // Predicated region
        $region33: #{tpu_custom_call.1} parent=11 // pred_check
          %p349 = pneg %p219
        $region34: #{tpu_custom_call.1} parent=11 // pred_check_branch
          %351 = sbr.rel (%p349) target = $region36
        $region35: #{tpu_custom_call.1} parent=11 // pred_region
          %s353 = ssub.s32 16, 16
          %354 = vsyncadd [#allocation17], %s353
          %s356 = sshll.u32 [#allocation16], 4
          %s357 = int_to_ptr.vmem [resolvable:$true] %s356
          %359 = dma.hbm_to_vmem [thread:$0]  %s7, 16, %s357, [#allocation17]
        $region36: #{tpu_custom_call.1} parent=11 // pred_fallthru
          _
        // Predicated region
        $region37: #{tpu_custom_call.1} parent=11 // pred_check
          %p360 = pneg %p245
        $region38: #{tpu_custom_call.1} parent=11 // pred_check_branch
          %362 = sbr.rel (%p360) target = $region40
        $region39: #{tpu_custom_call.1} parent=11 // pred_region
          %s364 = ssub.s32 128, 128
          %365 = vsyncadd [#allocation17], %s364
          %s366 = smul.addr %s37, 128
          %s367 = scalar_lea.hbm %s8, %s366
          %s369 = sshll.u32 [#allocation18], 4
          %s370 = int_to_ptr.vmem [resolvable:$true] %s369
          %372 = dma.hbm_to_vmem [thread:$0]  %s367, 128, %s370, [#allocation17]
        $region40: #{tpu_custom_call.1} parent=11 // pred_fallthru
          _
      $region12: #{tpu_custom_call.1} parent=5 // pred_fallthru
        _
      %p373 = scmp.lt.s32.totalorder %s27, 2
      // Predicated region
      $region41: #{tpu_custom_call.1} parent=5 // pred_check
        %p374 = pneg %p373
      $region42: #{tpu_custom_call.1} parent=5 // pred_check_branch
        %376 = sbr.rel (%p374) target = $region44
      $region43: #{tpu_custom_call.1} parent=5 // pred_region
        // Predicated region
        $region45: #{tpu_custom_call.1} parent=43 // pred_check
          %p377 = pneg %p59
        $region46: #{tpu_custom_call.1} parent=43 // pred_check_branch
          %379 = sbr.rel (%p377) target = $region48
        $region47: #{tpu_custom_call.1} parent=43 // pred_region
          %s380 = sand.u32 %s49, 1
          %s381 = scalar_lea.sflag [#allocation5], %s380
          %s382 = sand.u32 %s49, 1
          %s383 = smul.addr %s382, 8
          %s384 = scalar_lea.vmem [#allocation4], %s383
          %s386 = ssub.s32 128, 128
          %387 = vsyncadd %s381, %s386
          %s388 = smul.addr %s34, 128
          %s389 = scalar_lea.hbm %s0, %s388
          %s391 = sshll.u32 %s384, 4
          %s392 = int_to_ptr.vmem [resolvable:$true] %s391
          %394 = dma.hbm_to_vmem [thread:$0]  %s389, 128, %s392, %s381
        $region48: #{tpu_custom_call.1} parent=43 // pred_fallthru
          _
        // Predicated region
        $region49: #{tpu_custom_call.1} parent=43 // pred_check
          %p395 = pneg %p87
        $region50: #{tpu_custom_call.1} parent=43 // pred_check_branch
          %397 = sbr.rel (%p395) target = $region52
        $region51: #{tpu_custom_call.1} parent=43 // pred_region
          %s398 = sand.u32 %s27, 1
          %s399 = scalar_lea.sflag [#allocation8], %s398
          %s400 = sand.u32 %s77, 1
          %s401 = smul.addr %s400, 8
          %s402 = scalar_lea.vmem [#allocation7], %s401
          %s404 = ssub.s32 128, 128
          %405 = vsyncadd %s399, %s404
          %s406 = sadd.s32 %s35, %s34
          %s407 = smul.addr %s406, 128
          %s408 = scalar_lea.hbm %s1, %s407
          %s410 = sshll.u32 %s402, 4
          %s411 = int_to_ptr.vmem [resolvable:$true] %s410
          %413 = dma.hbm_to_vmem [thread:$0]  %s408, 128, %s411, %s399
        $region52: #{tpu_custom_call.1} parent=43 // pred_fallthru
          _
      $region44: #{tpu_custom_call.1} parent=5 // pred_fallthru
        _
      %p414 = scmp.le.s32.totalorder 1, %s27
      %p415 = scmp.lt.s32.totalorder %s27, 3
      %p416 = pnand %p414, %p415
      %p417 = pneg %p416
      // Predicated region
      $region53: #{tpu_custom_call.1} parent=5 // pred_check
        _
      $region54: #{tpu_custom_call.1} parent=5 // pred_check_branch
        %419 = sbr.rel (%p416) target = $region56
      $region55: #{tpu_custom_call.1} parent=5 // pred_region
        %s420 = ssub.s32 %s27, 1
        %s421 = sand.u32 %s52, 1
        %s422 = scalar_lea.sflag [#allocation5], %s421
        %s423 = sand.u32 %s52, 1
        %s424 = smul.addr %s423, 8
        %s425 = scalar_lea.vmem [#allocation4], %s424
        // Predicated region
        $region57: #{tpu_custom_call.1} parent=55 // pred_check
          %p426 = pneg %p65
        $region58: #{tpu_custom_call.1} parent=55 // pred_check_branch
          %428 = sbr.rel (%p426) target = $region60
        $region59: #{tpu_custom_call.1} parent=55 // pred_region
          %429 = dma.done %s422, 128
        $region60: #{tpu_custom_call.1} parent=55 // pred_fallthru
          _
        %s430 = sand.u32 %s32, 1
        %s431 = scalar_lea.sflag [#allocation8], %s430
        %s432 = sand.u32 %s80, 1
        %s433 = smul.addr %s432, 8
        %s434 = scalar_lea.vmem [#allocation7], %s433
        // Predicated region
        $region61: #{tpu_custom_call.1} parent=55 // pred_check
          %p435 = pneg %p93
        $region62: #{tpu_custom_call.1} parent=55 // pred_check_branch
          %437 = sbr.rel (%p435) target = $region64
        $region63: #{tpu_custom_call.1} parent=55 // pred_region
          %438 = dma.done %s431, 128
        $region64: #{tpu_custom_call.1} parent=55 // pred_fallthru
          _
        // Predicated region
        $region65: #{tpu_custom_call.1} parent=55 // pred_check
          %p439 = pneg %p114
        $region66: #{tpu_custom_call.1} parent=55 // pred_check_branch
          %441 = sbr.rel (%p439) target = $region68
        $region67: #{tpu_custom_call.1} parent=55 // pred_region
          %442 = dma.done [#allocation8], 512
        $region68: #{tpu_custom_call.1} parent=55 // pred_fallthru
          _
        // Predicated region
        $region69: #{tpu_custom_call.1} parent=55 // pred_check
          %p443 = pneg %p135
        $region70: #{tpu_custom_call.1} parent=55 // pred_check_branch
          %445 = sbr.rel (%p443) target = $region72
        $region71: #{tpu_custom_call.1} parent=55 // pred_region
          %446 = dma.done [#allocation11], 16
        $region72: #{tpu_custom_call.1} parent=55 // pred_fallthru
          _
        // Predicated region
        $region73: #{tpu_custom_call.1} parent=55 // pred_check
          %p447 = pneg %p156
        $region74: #{tpu_custom_call.1} parent=55 // pred_check_branch
          %449 = sbr.rel (%p447) target = $region76
        $region75: #{tpu_custom_call.1} parent=55 // pred_region
          %450 = dma.done [#allocation11], 1024
        $region76: #{tpu_custom_call.1} parent=55 // pred_fallthru
          _
        // Predicated region
        $region77: #{tpu_custom_call.1} parent=55 // pred_check
          %p451 = pneg %p177
        $region78: #{tpu_custom_call.1} parent=55 // pred_check_branch
          %453 = sbr.rel (%p451) target = $region80
        $region79: #{tpu_custom_call.1} parent=55 // pred_region
          %454 = dma.done [#allocation14], 32
        $region80: #{tpu_custom_call.1} parent=55 // pred_fallthru
          _
        // Predicated region
        $region81: #{tpu_custom_call.1} parent=55 // pred_check
          %p455 = pneg %p198
        $region82: #{tpu_custom_call.1} parent=55 // pred_check_branch
          %457 = sbr.rel (%p455) target = $region84
        $region83: #{tpu_custom_call.1} parent=55 // pred_region
          %458 = dma.done [#allocation14], 2048
        $region84: #{tpu_custom_call.1} parent=55 // pred_fallthru
          _
        // Predicated region
        $region85: #{tpu_custom_call.1} parent=55 // pred_check
          %p459 = pneg %p219
        $region86: #{tpu_custom_call.1} parent=55 // pred_check_branch
          %461 = sbr.rel (%p459) target = $region88
        $region87: #{tpu_custom_call.1} parent=55 // pred_region
          %462 = dma.done [#allocation17], 16
        $region88: #{tpu_custom_call.1} parent=55 // pred_fallthru
          _
        // Predicated region
        $region89: #{tpu_custom_call.1} parent=55 // pred_check
          %p463 = pneg %p245
        $region90: #{tpu_custom_call.1} parent=55 // pred_check_branch
          %465 = sbr.rel (%p463) target = $region92
        $region91: #{tpu_custom_call.1} parent=55 // pred_region
          %466 = dma.done [#allocation17], 128
        $region92: #{tpu_custom_call.1} parent=55 // pred_fallthru
          _
        %s467 = sand.u32 %s52, 1
        %s468 = scalar_lea.sflag [#allocation5], %s467
        %s469 = sand.u32 %s52, 1
        %s470 = smul.addr %s469, 8
        %s471 = scalar_lea.vmem [#allocation4], %s470
        %p472 = pneg %p65
        %p473 = pneg %p62
        %s474 = sand.u32 %s32, 1
        %s475 = scalar_lea.sflag [#allocation8], %s474
        %s476 = sand.u32 %s80, 1
        %s477 = smul.addr %s476, 8
        %s478 = scalar_lea.vmem [#allocation7], %s477
        %p479 = pneg %p93
        %p480 = pneg %p90
        %p481 = pneg %p114
        %p482 = pneg %p111
        %p483 = pneg %p135
        %p484 = pneg %p132
        %p485 = pneg %p156
        %p486 = pneg %p153
        %p487 = pneg %p177
        %p488 = pneg %p174
        %p489 = pneg %p198
        %p490 = pneg %p195
        %p491 = pneg %p219
        %p492 = pneg %p216
        %p493 = pneg %p245
        %p494 = pneg %p242
        %p495 = pneg %p273
        %p496 = pneg %p270
        %s497 = sand.u32 %s260, 1
        %s498 = scalar_lea.sflag [#allocation6], %s497
        %s499 = sand.u32 %s260, 1
        %s500 = smul.addr %s499, 8
        %s501 = scalar_lea.vmem [#allocation19], %s500
        %p502 = scmp.eq.s32.totalorder %s37, 0
        // Predicated region
        $region93: #{tpu_custom_call.1} parent=55 // pred_check
          %p503 = pneg %p502
        $region94: #{tpu_custom_call.1} parent=55 // pred_check_branch
          %505 = sbr.rel (%p503) target = $region96
        $region95: #{tpu_custom_call.1} parent=55 // pred_region
          %v506 = vld [vmem:[%s425] sm:$0xff]
          %v507 = vld [vmem:[#allocation12] sm:$0xff]
          %v508 = vld [vmem:[#allocation12 + $0x8] sm:$0xff]
          %v509 = vld [vmem:[#allocation12 + $0x10] sm:$0xff]
          %v510 = vld [vmem:[#allocation12 + $0x18] sm:$0xff]
          %v511 = vld [vmem:[#allocation12 + $0x20] sm:$0xff]
          %v512 = vld [vmem:[#allocation12 + $0x28] sm:$0xff]
          %v513 = vld [vmem:[#allocation12 + $0x30] sm:$0xff]
          %v514 = vld [vmem:[#allocation12 + $0x38] sm:$0xff]
          %v515 = vld [vmem:[#allocation13] sm:$0x3]
          %v517 = vlaneseq
          %v518 = vshrl.u32 %v517, 7
          %v519 = vsub.s32 0, %v518
          %v520 = vrot.slane %v515, %v519
          %v521 = vlaneseq
          %v522 = vshrl.u32 %v521, 7
          %v523 = vsub.s32 1, %v522
          %v524 = vrot.slane %v515, %v523
          %vm527 = vcmask 261120
          %v529 = vsel %vm527, %v506, 0
          %531 = vmatprep.subr.mxu0 %v508
          %532 = vmatpush1.msra.mxu0 %v507
          %533 = vmatprep.subr.mxu0 %v510
          %534 = vmatpush1.msra.mxu0 %v509
          %535 = vmatprep.subr.mxu0 %v512
          %536 = vmatpush1.msra.mxu0 %v511
          %537 = vmatprep.subr.mxu0 %v514
          %538 = vmatpush1.msra.mxu0 %v513
          %539 = vmatprep.subr.mxu0 0.0
          %540 = vmatpush1.msra.mxu0 0.0
          %541 = vmatprep.subr.mxu0 0.0
          %542 = vmatpush1.msra.mxu0 0.0
          %543 = vmatprep.subr.mxu0 0.0
          %544 = vmatpush1.msra.mxu0 0.0
          %545 = vmatprep.subr.mxu0 0.0
          %546 = vmatpush1.msra.mxu0 0.0
          %547 = vmatprep.subr.mxu0 0.0
          %548 = vmatpush1.msra.mxu0 0.0
          %549 = vmatprep.subr.mxu0 0.0
          %550 = vmatpush1.msra.mxu0 0.0
          %551 = vmatprep.subr.mxu0 0.0
          %552 = vmatpush1.msra.mxu0 0.0
          %553 = vmatprep.subr.mxu0 0.0
          %554 = vmatpush1.msra.mxu0 0.0
          %555 = vmatprep.subr.mxu0 0.0
          %556 = vmatpush1.msra.mxu0 0.0
          %557 = vmatprep.subr.mxu0 0.0
          %558 = vmatpush1.msra.mxu0 0.0
          %559 = vmatprep.subr.mxu0 0.0
          %560 = vmatpush1.msra.mxu0 0.0
          %561 = vmatprep.subr.mxu0 0.0
          %562 = vmatpush1.msra.mxu0 0.0
          %563 = vmatprep.subr.mxu0 0.0
          %564 = vmatpush1.msra.mxu0 0.0
          %565 = vmatprep.subr.mxu0 0.0
          %566 = vmatpush1.msra.mxu0 0.0
          %567 = vmatprep.subr.mxu0 0.0
          %568 = vmatpush1.msra.mxu0 0.0
          %569 = vmatprep.subr.mxu0 0.0
          %570 = vmatpush1.msra.mxu0 0.0
          %571 = vmatprep.subr.mxu0 0.0
          %572 = vmatpush1.msra.mxu0 0.0
          %573 = vmatprep.subr.mxu0 0.0
          %574 = vmatpush1.msra.mxu0 0.0
          %575 = vmatprep.subr.mxu0 0.0
          %576 = vmatpush1.msra.mxu0 0.0
          %577 = vmatprep.subr.mxu0 0.0
          %578 = vmatpush1.msra.mxu0 0.0
          %579 = vmatprep.subr.mxu0 0.0
          %580 = vmatpush1.msra.mxu0 0.0
          %581 = vmatprep.subr.mxu0 0.0
          %582 = vmatpush1.msra.mxu0 0.0
          %583 = vmatprep.subr.mxu0 0.0
          %584 = vmatpush1.msra.mxu0 0.0
          %585 = vmatprep.subr.mxu0 0.0
          %586 = vmatpush1.msra.mxu0 0.0
          %587 = vmatprep.subr.mxu0 0.0
          %588 = vmatpush1.msra.mxu0 0.0
          %589 = vmatprep.subr.mxu0 0.0
          %590 = vmatpush1.msra.mxu0 0.0
          %591 = vmatprep.subr.mxu0 0.0
          %592 = vmatpush1.msra.mxu0 0.0
          %593 = vmatprep.subr.mxu0 0.0
          %594 = vmatpush1.msra.mxu0 0.0
          %595 = vmatprep.mubr.f32.mxu0 0.0
          %596 = vmatmul.mubr.f32.gmra.mrb[0].mxu0 %v529
          %v597 = vpop.f32.mrb[0].mxu0
          %v598 = vadd.f32 %v520, %v597
          %v599 = vpop.f32.mrb[0].mxu0
          %v600 = vadd.f32 %v524, %v599
          %601 = vdwg.mxu0
          %602 = vst [vmem:[#allocation2] sm:$0xff] %v600
          %v603 = vld [vmem:[#allocation15] sm:$0xff]
          %v604 = vld [vmem:[#allocation15 + $0x8] sm:$0xff]
          %v605 = vld [vmem:[#allocation15 + $0x10] sm:$0xff]
          %v606 = vld [vmem:[#allocation15 + $0x18] sm:$0xff]
          %v607 = vld [vmem:[#allocation15 + $0x20] sm:$0xff]
          %v608 = vld [vmem:[#allocation15 + $0x28] sm:$0xff]
          %v609 = vld [vmem:[#allocation15 + $0x30] sm:$0xff]
          %v610 = vld [vmem:[#allocation15 + $0x38] sm:$0xff]
          %v611 = vld [vmem:[#allocation15 + $0x40] sm:$0xff]
          %v612 = vld [vmem:[#allocation15 + $0x48] sm:$0xff]
          %v613 = vld [vmem:[#allocation15 + $0x50] sm:$0xff]
          %v614 = vld [vmem:[#allocation15 + $0x58] sm:$0xff]
          %v615 = vld [vmem:[#allocation15 + $0x60] sm:$0xff]
          %v616 = vld [vmem:[#allocation15 + $0x68] sm:$0xff]
          %v617 = vld [vmem:[#allocation15 + $0x70] sm:$0xff]
          %v618 = vld [vmem:[#allocation15 + $0x78] sm:$0xff]
          %619 = vmatprep.subr.mxu0 0.0
          %620 = vmatpush1.msra.mxu0 %v603
          %621 = vmatprep.subr.mxu0 0.0
          %622 = vmatpush1.msra.mxu0 %v604
          %623 = vmatprep.subr.mxu0 0.0
          %624 = vmatpush1.msra.mxu0 %v605
          %625 = vmatprep.subr.mxu0 0.0
          %626 = vmatpush1.msra.mxu0 %v606
          %627 = vmatprep.subr.mxu0 0.0
          %628 = vmatpush1.msra.mxu0 %v607
          %629 = vmatprep.subr.mxu0 0.0
          %630 = vmatpush1.msra.mxu0 %v608
          %631 = vmatprep.subr.mxu0 0.0
          %632 = vmatpush1.msra.mxu0 %v609
          %633 = vmatprep.subr.mxu0 0.0
          %634 = vmatpush1.msra.mxu0 %v610
          %635 = vmatprep.subr.mxu0 0.0
          %636 = vmatpush1.msra.mxu0 %v611
          %637 = vmatprep.subr.mxu0 0.0
          %638 = vmatpush1.msra.mxu0 %v612
          %639 = vmatprep.subr.mxu0 0.0
          %640 = vmatpush1.msra.mxu0 %v613
          %641 = vmatprep.subr.mxu0 0.0
          %642 = vmatpush1.msra.mxu0 %v614
          %643 = vmatprep.subr.mxu0 0.0
          %644 = vmatpush1.msra.mxu0 %v615
          %645 = vmatprep.subr.mxu0 0.0
          %646 = vmatpush1.msra.mxu0 %v616
          %647 = vmatprep.subr.mxu0 0.0
          %648 = vmatpush1.msra.mxu0 %v617
          %649 = vmatprep.subr.mxu0 0.0
          %650 = vmatpush1.msra.mxu0 %v618
          %651 = vmatprep.subr.mxu0 0.0
          %652 = vmatpush1.msra.mxu0 0.0
          %653 = vmatprep.subr.mxu0 0.0
          %654 = vmatpush1.msra.mxu0 0.0
          %655 = vmatprep.subr.mxu0 0.0
          %656 = vmatpush1.msra.mxu0 0.0
          %657 = vmatprep.subr.mxu0 0.0
          %658 = vmatpush1.msra.mxu0 0.0
          %659 = vmatprep.subr.mxu0 0.0
          %660 = vmatpush1.msra.mxu0 0.0
          %661 = vmatprep.subr.mxu0 0.0
          %662 = vmatpush1.msra.mxu0 0.0
          %663 = vmatprep.subr.mxu0 0.0
          %664 = vmatpush1.msra.mxu0 0.0
          %665 = vmatprep.subr.mxu0 0.0
          %666 = vmatpush1.msra.mxu0 0.0
          %667 = vmatprep.subr.mxu0 0.0
          %668 = vmatpush1.msra.mxu0 0.0
          %669 = vmatprep.subr.mxu0 0.0
          %670 = vmatpush1.msra.mxu0 0.0
          %671 = vmatprep.subr.mxu0 0.0
          %672 = vmatpush1.msra.mxu0 0.0
          %673 = vmatprep.subr.mxu0 0.0
          %674 = vmatpush1.msra.mxu0 0.0
          %675 = vmatprep.subr.mxu0 0.0
          %676 = vmatpush1.msra.mxu0 0.0
          %677 = vmatprep.subr.mxu0 0.0
          %678 = vmatpush1.msra.mxu0 0.0
          %679 = vmatprep.subr.mxu0 0.0
          %680 = vmatpush1.msra.mxu0 0.0
          %681 = vmatprep.subr.mxu0 0.0
          %682 = vmatpush1.msra.mxu0 0.0
          %683 = vmatprep.mubr.f32.mxu0 0.0
          %684 = vmatmul.mubr.f32.gmra.mrb[0].mxu0 %v598
          %v685 = vpop.f32.mrb[0].mxu0
          %v686 = vadd.f32 0.0, %v685
          %v687 = vpop.f32.mrb[0].mxu0
          %688 = vdwg.mxu0
          %689 = vst.msk [vmem:[#allocation3] sm:$0xff] %vm527, %v686
        $region96: #{tpu_custom_call.1} parent=55 // pred_fallthru
          _
        %v690 = vld [vmem:[%s434] sm:$0xff]
        %v691 = vld [vmem:[#allocation9] sm:$0xff]
        %v692 = vld [vmem:[#allocation9 + $0x8] sm:$0xff]
        %v693 = vld [vmem:[#allocation9 + $0x10] sm:$0xff]
        %v694 = vld [vmem:[#allocation9 + $0x18] sm:$0xff]
        %v695 = vld [vmem:[#allocation10] sm:$0x1]
        %v697 = vlaneseq
        %v698 = vshrl.u32 %v697, 7
        %v699 = vsub.s32 0, %v698
        %v700 = vrot.slane %v695, %v699
        %vm702 = vcmask 261120
        %v704 = vsel %vm702, %v690, 0
        %706 = vmatprep.subr.mxu0 0.0
        %707 = vmatpush1.msra.mxu0 %v691
        %708 = vmatprep.subr.mxu0 0.0
        %709 = vmatpush1.msra.mxu0 %v692
        %710 = vmatprep.subr.mxu0 0.0
        %711 = vmatpush1.msra.mxu0 %v693
        %712 = vmatprep.subr.mxu0 0.0
        %713 = vmatpush1.msra.mxu0 %v694
        %714 = vmatprep.subr.mxu0 0.0
        %715 = vmatpush1.msra.mxu0 0.0
        %716 = vmatprep.subr.mxu0 0.0
        %717 = vmatpush1.msra.mxu0 0.0
        %718 = vmatprep.subr.mxu0 0.0
        %719 = vmatpush1.msra.mxu0 0.0
        %720 = vmatprep.subr.mxu0 0.0
        %721 = vmatpush1.msra.mxu0 0.0
        %722 = vmatprep.subr.mxu0 0.0
        %723 = vmatpush1.msra.mxu0 0.0
        %724 = vmatprep.subr.mxu0 0.0
        %725 = vmatpush1.msra.mxu0 0.0
        %726 = vmatprep.subr.mxu0 0.0
        %727 = vmatpush1.msra.mxu0 0.0
        %728 = vmatprep.subr.mxu0 0.0
        %729 = vmatpush1.msra.mxu0 0.0
        %730 = vmatprep.subr.mxu0 0.0
        %731 = vmatpush1.msra.mxu0 0.0
        %732 = vmatprep.subr.mxu0 0.0
        %733 = vmatpush1.msra.mxu0 0.0
        %734 = vmatprep.subr.mxu0 0.0
        %735 = vmatpush1.msra.mxu0 0.0
        %736 = vmatprep.subr.mxu0 0.0
        %737 = vmatpush1.msra.mxu0 0.0
        %738 = vmatprep.subr.mxu0 0.0
        %739 = vmatpush1.msra.mxu0 0.0
        %740 = vmatprep.subr.mxu0 0.0
        %741 = vmatpush1.msra.mxu0 0.0
        %742 = vmatprep.subr.mxu0 0.0
        %743 = vmatpush1.msra.mxu0 0.0
        %744 = vmatprep.subr.mxu0 0.0
        %745 = vmatpush1.msra.mxu0 0.0
        %746 = vmatprep.subr.mxu0 0.0
        %747 = vmatpush1.msra.mxu0 0.0
        %748 = vmatprep.subr.mxu0 0.0
        %749 = vmatpush1.msra.mxu0 0.0
        %750 = vmatprep.subr.mxu0 0.0
        %751 = vmatpush1.msra.mxu0 0.0
        %752 = vmatprep.subr.mxu0 0.0
        %753 = vmatpush1.msra.mxu0 0.0
        %754 = vmatprep.subr.mxu0 0.0
        %755 = vmatpush1.msra.mxu0 0.0
        %756 = vmatprep.subr.mxu0 0.0
        %757 = vmatpush1.msra.mxu0 0.0
        %758 = vmatprep.subr.mxu0 0.0
        %759 = vmatpush1.msra.mxu0 0.0
        %760 = vmatprep.subr.mxu0 0.0
        %761 = vmatpush1.msra.mxu0 0.0
        %762 = vmatprep.subr.mxu0 0.0
        %763 = vmatpush1.msra.mxu0 0.0
        %764 = vmatprep.subr.mxu0 0.0
        %765 = vmatpush1.msra.mxu0 0.0
        %766 = vmatprep.subr.mxu0 0.0
        %767 = vmatpush1.msra.mxu0 0.0
        %768 = vmatprep.subr.mxu0 0.0
        %769 = vmatpush1.msra.mxu0 0.0
        %770 = vmatprep.mubr.f32.mxu0 0.0
        %771 = vmatmul.mubr.f32.gmra.mrb[0].mxu0 %v704
        %v772 = vpop.f32.mrb[0].mxu0
        %v773 = vadd.f32 %v700, %v772
        %v774 = vpop.f32.mrb[0].mxu0
        %775 = vdwg.mxu0
        %v776 = vld [vmem:[#allocation2] sm:$0xff]
        %777 = vmatprep.subr.mxu0 0.0
        %778 = vmatpush1.xpose.msra.mxu0 %v776
        %779 = vmatprep.subr.mxu0 0.0
        %780 = vmatpush1.xpose.msra.mxu0 0.0
        %781 = vmatprep.subr.mxu0 0.0
        %782 = vmatpush1.xpose.msra.mxu0 0.0
        %783 = vmatprep.subr.mxu0 0.0
        %784 = vmatpush1.xpose.msra.mxu0 0.0
        %785 = vmatprep.subr.mxu0 0.0
        %786 = vmatpush1.xpose.msra.mxu0 0.0
        %787 = vmatprep.subr.mxu0 0.0
        %788 = vmatpush1.xpose.msra.mxu0 0.0
        %789 = vmatprep.subr.mxu0 0.0
        %790 = vmatpush1.xpose.msra.mxu0 0.0
        %791 = vmatprep.subr.mxu0 0.0
        %792 = vmatpush1.xpose.msra.mxu0 0.0
        %793 = vmatprep.subr.mxu0 0.0
        %794 = vmatpush1.xpose.msra.mxu0 0.0
        %795 = vmatprep.subr.mxu0 0.0
        %796 = vmatpush1.xpose.msra.mxu0 0.0
        %797 = vmatprep.subr.mxu0 0.0
        %798 = vmatpush1.xpose.msra.mxu0 0.0
        %799 = vmatprep.subr.mxu0 0.0
        %800 = vmatpush1.xpose.msra.mxu0 0.0
        %801 = vmatprep.subr.mxu0 0.0
        %802 = vmatpush1.xpose.msra.mxu0 0.0
        %803 = vmatprep.subr.mxu0 0.0
        %804 = vmatpush1.xpose.msra.mxu0 0.0
        %805 = vmatprep.subr.mxu0 0.0
        %806 = vmatpush1.xpose.msra.mxu0 0.0
        %807 = vmatprep.subr.mxu0 0.0
        %808 = vmatpush1.xpose.msra.mxu0 0.0
        %809 = vmatprep.subr.mxu0 0.0
        %810 = vmatpush1.xpose.msra.mxu0 0.0
        %811 = vmatprep.subr.mxu0 0.0
        %812 = vmatpush1.xpose.msra.mxu0 0.0
        %813 = vmatprep.subr.mxu0 0.0
        %814 = vmatpush1.xpose.msra.mxu0 0.0
        %815 = vmatprep.subr.mxu0 0.0
        %816 = vmatpush1.xpose.msra.mxu0 0.0
        %817 = vmatprep.subr.mxu0 0.0
        %818 = vmatpush1.xpose.msra.mxu0 0.0
        %819 = vmatprep.subr.mxu0 0.0
        %820 = vmatpush1.xpose.msra.mxu0 0.0
        %821 = vmatprep.subr.mxu0 0.0
        %822 = vmatpush1.xpose.msra.mxu0 0.0
        %823 = vmatprep.subr.mxu0 0.0
        %824 = vmatpush1.xpose.msra.mxu0 0.0
        %825 = vmatprep.subr.mxu0 0.0
        %826 = vmatpush1.xpose.msra.mxu0 0.0
        %827 = vmatprep.subr.mxu0 0.0
        %828 = vmatpush1.xpose.msra.mxu0 0.0
        %829 = vmatprep.subr.mxu0 0.0
        %830 = vmatpush1.xpose.msra.mxu0 0.0
        %831 = vmatprep.subr.mxu0 0.0
        %832 = vmatpush1.xpose.msra.mxu0 0.0
        %833 = vmatprep.subr.mxu0 0.0
        %834 = vmatpush1.xpose.msra.mxu0 0.0
        %835 = vmatprep.subr.mxu0 0.0
        %836 = vmatpush1.xpose.msra.mxu0 0.0
        %837 = vmatprep.subr.mxu0 0.0
        %838 = vmatpush1.xpose.msra.mxu0 0.0
        %839 = vmatprep.subr.mxu0 0.0
        %840 = vmatpush1.xpose.msra.mxu0 0.0
        %841 = vmatprep.mubr.f32.mxu0 0.0
        %842 = vmatmul.mubr.f32.gmra.mrb[0].mxu0 %v773
        %v843 = vpop.f32.mrb[0].mxu0
        %v844 = vadd.f32 0.0, %v843
        %v845 = vpop.f32.mrb[0].mxu0
        %846 = vdwg.mxu0
        %v847 = vld [vmem:[#allocation18] sm:$0xff]
        %v848 = vmul.f32 %v847, %v844
        %v849 = vld [vmem:[#allocation3] sm:$0xff]
        %v850 = vld [vmem:[#allocation16] sm:$0x1]
        %v852 = vlaneseq
        %v853 = vshrl.u32 %v852, 7
        %v854 = vsub.s32 0, %v853
        %v855 = vrot.slane %v850, %v854
        %vm857 = vcmask 64512
        %v859 = vsel %vm857, %v848, 0
        %861 = vmatprep.subr.mxu0 0.0
        %862 = vmatpush1.msra.mxu0 %v849
        %863 = vmatprep.subr.mxu0 0.0
        %864 = vmatpush1.msra.mxu0 0.0
        %865 = vmatprep.subr.mxu0 0.0
        %866 = vmatpush1.msra.mxu0 0.0
        %867 = vmatprep.subr.mxu0 0.0
        %868 = vmatpush1.msra.mxu0 0.0
        %869 = vmatprep.subr.mxu0 0.0
        %870 = vmatpush1.msra.mxu0 0.0
        %871 = vmatprep.subr.mxu0 0.0
        %872 = vmatpush1.msra.mxu0 0.0
        %873 = vmatprep.subr.mxu0 0.0
        %874 = vmatpush1.msra.mxu0 0.0
        %875 = vmatprep.subr.mxu0 0.0
        %876 = vmatpush1.msra.mxu0 0.0
        %877 = vmatprep.subr.mxu0 0.0
        %878 = vmatpush1.msra.mxu0 0.0
        %879 = vmatprep.subr.mxu0 0.0
        %880 = vmatpush1.msra.mxu0 0.0
        %881 = vmatprep.subr.mxu0 0.0
        %882 = vmatpush1.msra.mxu0 0.0
        %883 = vmatprep.subr.mxu0 0.0
        %884 = vmatpush1.msra.mxu0 0.0
        %885 = vmatprep.subr.mxu0 0.0
        %886 = vmatpush1.msra.mxu0 0.0
        %887 = vmatprep.subr.mxu0 0.0
        %888 = vmatpush1.msra.mxu0 0.0
        %889 = vmatprep.subr.mxu0 0.0
        %890 = vmatpush1.msra.mxu0 0.0
        %891 = vmatprep.subr.mxu0 0.0
        %892 = vmatpush1.msra.mxu0 0.0
        %893 = vmatprep.subr.mxu0 0.0
        %894 = vmatpush1.msra.mxu0 0.0
        %895 = vmatprep.subr.mxu0 0.0
        %896 = vmatpush1.msra.mxu0 0.0
        %897 = vmatprep.subr.mxu0 0.0
        %898 = vmatpush1.msra.mxu0 0.0
        %899 = vmatprep.subr.mxu0 0.0
        %900 = vmatpush1.msra.mxu0 0.0
        %901 = vmatprep.subr.mxu0 0.0
        %902 = vmatpush1.msra.mxu0 0.0
        %903 = vmatprep.subr.mxu0 0.0
        %904 = vmatpush1.msra.mxu0 0.0
        %905 = vmatprep.subr.mxu0 0.0
        %906 = vmatpush1.msra.mxu0 0.0
        %907 = vmatprep.subr.mxu0 0.0
        %908 = vmatpush1.msra.mxu0 0.0
        %909 = vmatprep.subr.mxu0 0.0
        %910 = vmatpush1.msra.mxu0 0.0
        %911 = vmatprep.subr.mxu0 0.0
        %912 = vmatpush1.msra.mxu0 0.0
        %913 = vmatprep.subr.mxu0 0.0
        %914 = vmatpush1.msra.mxu0 0.0
        %915 = vmatprep.subr.mxu0 0.0
        %916 = vmatpush1.msra.mxu0 0.0
        %917 = vmatprep.subr.mxu0 0.0
        %918 = vmatpush1.msra.mxu0 0.0
        %919 = vmatprep.subr.mxu0 0.0
        %920 = vmatpush1.msra.mxu0 0.0
        %921 = vmatprep.subr.mxu0 0.0
        %922 = vmatpush1.msra.mxu0 0.0
        %923 = vmatprep.subr.mxu0 0.0
        %924 = vmatpush1.msra.mxu0 0.0
        %925 = vmatprep.mubr.f32.mxu0 0.0
        %926 = vmatmul.mubr.f32.gmra.mrb[0].mxu0 %v859
        %v927 = vpop.f32.mrb[0].mxu0
        %v928 = vadd.f32 %v855, %v927
        %v929 = vpop.f32.mrb[0].mxu0
        %930 = vdwg.mxu0
        %931 = vst.msk [vmem:[%s501] sm:$0xff] %vm702, %v928
        %s932 = sand.u32 %s260, 1
        %s933 = scalar_lea.sflag [#allocation6], %s932
        %s934 = sand.u32 %s260, 1
        %s935 = smul.addr %s934, 8
        %s936 = scalar_lea.vmem [#allocation19], %s935
        // Predicated region
        $region97: #{tpu_custom_call.1} parent=55 // pred_check
          %p937 = pneg %p270
        $region98: #{tpu_custom_call.1} parent=55 // pred_check_branch
          %939 = sbr.rel (%p937) target = $region100
        $region99: #{tpu_custom_call.1} parent=55 // pred_region
          %s941 = ssub.s32 128, 128
          %942 = vsyncadd %s933, %s941
          %s943 = sadd.s32 %s37, %s36
          %s944 = smul.addr %s943, 128
          %s945 = scalar_lea.hbm %s9, %s944
          %s947 = sshll.u32 %s936, 4
          %s948 = int_to_ptr.vmem [resolvable:$true] %s947
          %950 = dma.vmem_to_hbm [thread:$0]  %s948, 128, %s945, %s933
        $region100: #{tpu_custom_call.1} parent=55 // pred_fallthru
          _
      $region56: #{tpu_custom_call.1} parent=5 // pred_fallthru
        _
      %p951 = scmp.le.s32.totalorder 2, %s27
      // Predicated region
      $region101: #{tpu_custom_call.1} parent=5 // pred_check
        %p952 = pneg %p951
      $region102: #{tpu_custom_call.1} parent=5 // pred_check_branch
        %954 = sbr.rel (%p952) target = $region104
      $region103: #{tpu_custom_call.1} parent=5 // pred_region
        %s955 = ssub.s32 %s27, 2
        // Predicated region
        $region105: #{tpu_custom_call.1} parent=103 // pred_check
          %p956 = pneg %p276
        $region106: #{tpu_custom_call.1} parent=103 // pred_check_branch
          %958 = sbr.rel (%p956) target = $region108
        $region107: #{tpu_custom_call.1} parent=103 // pred_region
          %s959 = sand.u32 %s261, 1
          %s960 = scalar_lea.sflag [#allocation6], %s959
          %s961 = sand.u32 %s261, 1
          %s962 = smul.addr %s961, 8
          %s963 = scalar_lea.vmem [#allocation19], %s962
          %964 = dma.done %s960, 128
        $region108: #{tpu_custom_call.1} parent=103 // pred_fallthru
          _
      $region104: #{tpu_custom_call.1} parent=5 // pred_fallthru
        _
    $region6: #{tpu_custom_call.1} parent=1 // loop_footer
      %s31 = sadd.s32 1, %s27
    $region7: #{tpu_custom_call.1} parent=1 // loop_footer_branch
      %26 = sbr.rel target = $region3
    $region8: #{tpu_custom_call.1} parent=1 // loop_exit
      _
    %965 = vsyncpa [#allocation5], 1
    %s966 = scalar_lea.sflag [#allocation5], 1
    %967 = vsyncpa %s966, 1
    %968 = vsyncpa [#allocation8], 1
    %s969 = scalar_lea.sflag [#allocation8], 1
    %970 = vsyncpa %s969, 1
    %971 = vsyncpa [#allocation11], 1
    %972 = vsyncpa [#allocation14], 1
    %973 = vsyncpa [#allocation17], 1
    %974 = vsyncpa [#allocation6], 1
    %s975 = scalar_lea.sflag [#allocation6], 1
    %976 = vsyncpa %s975, 1

</llo_original>
